<compile_context>
chip_gen: v5e
topology: v5e:2x2
jax: 0.10.0
libtpu: 0.0.40
codegen_flags: <defaults>
</compile_context>

<pallas_src>
import functools

import jax
import jax.numpy as jnp
from jax import lax
from jax.experimental import pallas as pl
from jax.experimental.pallas import tpu as pltpu


_INV_SQRT2 = 0.7071067811865476


def _gelu_exact(v):
    # PyTorch nn.GELU() default = exact erf form.
    return 0.5 * v * (1.0 + lax.erf(v * _INV_SQRT2))


def _round_up(n, m):
    return ((n + m - 1) // m) * m


def _cast(v, dtype):
    return v if dtype is None else v.astype(dtype)


def ffn_kernel_single(x_ref, w1_ref, b1_ref, w2_ref, b2_ref, out_ref,
                      *, mxu_dtype):
    """Whole-D_ff step: out = GELU(x @ W1 + b1) @ W2 + b2 (one row tile)."""
    x = _cast(x_ref[...], mxu_dtype)
    w1 = _cast(w1_ref[...], mxu_dtype)
    h = jnp.dot(x, w1, preferred_element_type=jnp.float32)
    h = _gelu_exact(h + b1_ref[...].astype(jnp.float32))

    h = _cast(h, mxu_dtype)
    w2 = _cast(w2_ref[...], mxu_dtype)
    y = jnp.dot(h, w2, preferred_element_type=jnp.float32)
    out_ref[...] = (y + b2_ref[...].astype(jnp.float32)).astype(out_ref.dtype)


def ffn_kernel_tiled(x_ref, w1_ref, b1_ref, w2_ref, b2_ref, out_ref, acc_ref,
                     *, mxu_dtype):
    """One (row-tile, D_ff-tile) step with an f32 VMEM accumulator.

    grid axis 0: row tiles   ("parallel", megacore-shardable)
    grid axis 1: D_ff tiles  ("arbitrary", reduction into acc_ref)
    """
    j = pl.program_id(1)

    @pl.when(j == 0)
    def _():
        acc_ref[...] = jnp.zeros_like(acc_ref)

    x = _cast(x_ref[...], mxu_dtype)
    w1 = _cast(w1_ref[...], mxu_dtype)

    # Matmul 1 (MXU, f32 accumulate) + per-tile bias + exact GELU in f32.
    h = jnp.dot(x, w1, preferred_element_type=jnp.float32)
    h = _gelu_exact(h + b1_ref[...].astype(jnp.float32))

    h = _cast(h, mxu_dtype)
    w2 = _cast(w2_ref[...], mxu_dtype)

    # Matmul 2 (MXU), accumulated over D_ff tiles in f32 VMEM scratch.
    acc_ref[...] += jnp.dot(h, w2, preferred_element_type=jnp.float32)

    # b2 is added exactly once, after the full D_ff reduction.
    @pl.when(j == pl.num_programs(1) - 1)
    def _():
        out_ref[...] = (acc_ref[...]
                        + b2_ref[...].astype(jnp.float32)).astype(out_ref.dtype)


def _pick_ff_tile(D_ff, block_ff):
    """Largest multiple of 128 <= block_ff that divides D_ff (else D_ff)."""
    if D_ff <= block_ff:
        return D_ff
    bf = (block_ff // 128) * 128
    while bf >= 128:
        if D_ff % bf == 0:
            return bf
        bf -= 128
    return D_ff


@functools.partial(jax.jit,
                   static_argnames=("block_rows", "block_ff", "mxu_dtype"))
def transformer_feed_forward(x, params, *, block_rows=128, block_ff=512,
                             mxu_dtype=None):
    *lead, D = x.shape
    x2 = x.reshape(-1, D)
    N = x2.shape[0]
    D_ff = params["w1"].shape[1]

    # Row tile: 128 rows when the batch allows it (full MXU), otherwise only
    # pad to the sublane multiple of 8.
    br = min(block_rows, _round_up(N, 8))
    br = max(8, _round_up(br, 8))
    n_pad = _round_up(N, br)
    if n_pad != N:
        x2 = jnp.pad(x2, ((0, n_pad - N), (0, 0)))

    bf = _pick_ff_tile(D_ff, block_ff)
    grid_rows = n_pad // br
    grid_ff = D_ff // bf

    bytes_per = jnp.dtype(x.dtype).itemsize
    cost = pl.CostEstimate(
        flops=4 * n_pad * D * D_ff,
        transcendentals=n_pad * D_ff,
        bytes_accessed=(x2.size + params["w1"].size + params["b1"].size
                        + params["w2"].size + params["b2"].size
                        + n_pad * D) * bytes_per,
    )
    cparams = pltpu.CompilerParams(
        dimension_semantics=("parallel", "arbitrary"),
        vmem_limit_bytes=64 * 1024 * 1024,
    )

    if grid_ff == 1:
        # Fast path: no accumulator scratch, no init/finalize branches.
        out = pl.pallas_call(
            functools.partial(ffn_kernel_single, mxu_dtype=mxu_dtype),
            out_shape=jax.ShapeDtypeStruct((n_pad, D), x.dtype),
            grid_spec=pltpu.PrefetchScalarGridSpec(
                num_scalar_prefetch=0,
                grid=(grid_rows, 1),
                in_specs=[
                    pl.BlockSpec((br, D), lambda i, j: (i, 0)),     # x row tile
                    pl.BlockSpec((D, D_ff), lambda i, j: (0, 0)),   # W1
                    pl.BlockSpec((1, D_ff), lambda i, j: (0, 0)),   # b1
                    pl.BlockSpec((D_ff, D), lambda i, j: (0, 0)),   # W2
                    pl.BlockSpec((1, D), lambda i, j: (0, 0)),      # b2
                ],
                out_specs=pl.BlockSpec((br, D), lambda i, j: (i, 0)),
            ),
            compiler_params=cparams,
            cost_estimate=cost,
        )(x2, params["w1"], params["b1"], params["w2"], params["b2"])
    else:
        out = pl.pallas_call(
            functools.partial(ffn_kernel_tiled, mxu_dtype=mxu_dtype),
            out_shape=jax.ShapeDtypeStruct((n_pad, D), x.dtype),
            grid_spec=pltpu.PrefetchScalarGridSpec(
                num_scalar_prefetch=0,
                grid=(grid_rows, grid_ff),
                in_specs=[
                    pl.BlockSpec((br, D), lambda i, j: (i, 0)),   # x row tile
                    pl.BlockSpec((D, bf), lambda i, j: (0, j)),   # W1 D_ff tile
                    pl.BlockSpec((1, bf), lambda i, j: (0, j)),   # b1 D_ff tile
                    pl.BlockSpec((bf, D), lambda i, j: (j, 0)),   # W2 D_ff tile
                    pl.BlockSpec((1, D), lambda i, j: (0, 0)),    # b2 (finalize)
                ],
                out_specs=pl.BlockSpec((br, D), lambda i, j: (i, 0)),
                scratch_shapes=[pltpu.VMEM((br, D), jnp.float32)],
            ),
            compiler_params=cparams,
            cost_estimate=cost,
        )(x2, params["w1"], params["b1"], params["w2"], params["b2"])

    out = out[:N]
    return out.reshape(*lead, D)


def reference(x, p):
    g = lambda v: 0.5 * v * (1.0 + lax.erf(v * _INV_SQRT2))
    h = g(jnp.einsum("...d,df->...f", x, p["w1"]) + p["b1"])
    return jnp.einsum("...f,fd->...d", h, p["w2"]) + p["b2"]


def init_params(key, D, D_ff, dtype=jnp.float32):
    kw1, kb1, kw2, kb2 = jax.random.split(key, 4)

    def lin(kw, kb, fan_in, fan_out):
        bound = fan_in ** -0.5
        w = jax.random.uniform(kw, (fan_in, fan_out), dtype, -bound, bound)
        b = jax.random.uniform(kb, (1, fan_out), dtype, -bound, bound)
        return w, b

    w1, b1 = lin(kw1, kb1, D, D_ff)
    w2, b2 = lin(kw2, kb2, D_ff, D)
    return {"w1": w1, "b1": b1, "w2": w2, "b2": b2}


if __name__ == "__main__":
    B, S, D, D_ff = 2, 8, 128, 256
    key = jax.random.PRNGKey(0)
    kx, kp = jax.random.split(key)

    x = jax.random.normal(kx, (B, S, D), jnp.float32)
    params = init_params(kp, D, D_ff)
    y_ref = reference(x, params)

    # Tiled-D_ff path (block_ff=128 -> 2 reduction steps into the accumulator).
    y_tiled = transformer_feed_forward(x, params, block_rows=128, block_ff=128)
    jax.block_until_ready(y_tiled)
    assert y_tiled.shape == x.shape
    err = float(jnp.max(jnp.abs(y_tiled - y_ref)))
    assert jnp.allclose(y_tiled, y_ref, atol=2e-3, rtol=2e-3), f"tiled err {err}"

    # Single-tile fast path (D_ff fits in one block).
    y_single = transformer_feed_forward(x, params, block_rows=128, block_ff=512)
    jax.block_until_ready(y_single)
    err = float(jnp.max(jnp.abs(y_single - y_ref)))
    assert jnp.allclose(y_single, y_ref, atol=2e-3, rtol=2e-3), f"single err {err}"

    print("KERNEL_OK")
</pallas_src>

<mosaic_0001>
module attributes {stable_mosaic.version = 11 : i64} {
  func.func @ffn_kernel_tiled(%arg0: i32, %arg1: i32, %arg2: memref<16x128xf32, #tpu.memory_space<vmem>>, %arg3: memref<128x128xf32, #tpu.memory_space<vmem>>, %arg4: memref<1x128xf32, #tpu.memory_space<vmem>>, %arg5: memref<128x128xf32, #tpu.memory_space<vmem>>, %arg6: memref<1x128xf32, #tpu.memory_space<vmem>>, %arg7: memref<16x128xf32, #tpu.memory_space<vmem>>, %arg8: memref<16x128xf32, #tpu.memory_space<vmem>>) attributes {dimension_semantics = [#tpu.dimension_semantics<parallel>, #tpu.dimension_semantics<arbitrary>], iteration_bounds = array<i64: 1, 2>, scalar_prefetch = 0 : i64, scratch_operands = 1 : i64, tpu.core_type = #tpu.core_type<tc>, window_params = [{transform_indices = @transform_0, window_bounds = array<i64: 16, 128>}, {transform_indices = @transform_1, window_bounds = array<i64: 128, 128>}, {transform_indices = @transform_2, window_bounds = array<i64: 1, 128>}, {transform_indices = @transform_3, window_bounds = array<i64: 128, 128>}, {pipeline_mode = #tpu.pipeline_mode<synchronous>, transform_indices = @transform_4, window_bounds = array<i64: 1, 128>}, {transform_indices = @transform_5, window_bounds = array<i64: 16, 128>}]} {
    %c0_i32 = arith.constant 0 : i32
    %0 = arith.cmpi eq, %arg1, %c0_i32 : i32
    %1 = arith.extui %0 : i1 to i32
    %c0_i32_0 = arith.constant 0 : i32
    %2 = arith.cmpi ne, %1, %c0_i32_0 : i32
    scf.if %2 {
      %cst_17 = arith.constant 0.000000e+00 : f32
      %25 = vector.broadcast %cst_17 : f32 to vector<16x128xf32>
      %c0_18 = arith.constant 0 : index
      %c0_19 = arith.constant 0 : index
      %26 = vector.load %arg8[%c0_18, %c0_19] : memref<16x128xf32, #tpu.memory_space<vmem>>, vector<16x128xf32>
      tpu.vector_store %arg8[%c0_18, %c0_19], %25 {strides = array<i32>} : memref<16x128xf32, #tpu.memory_space<vmem>>, vector<16x128xf32>,
    } else {
    }
    %c0 = arith.constant 0 : index
    %c0_1 = arith.constant 0 : index
    %3 = vector.load %arg2[%c0, %c0_1] : memref<16x128xf32, #tpu.memory_space<vmem>>, vector<16x128xf32>
    %c0_2 = arith.constant 0 : index
    %c0_3 = arith.constant 0 : index
    %4 = vector.load %arg3[%c0_2, %c0_3] : memref<128x128xf32, #tpu.memory_space<vmem>>, vector<128x128xf32>
    %cst = arith.constant dense<0.000000e+00> : vector<16x128xf32>
    %5 = tpu.matmul %3, %4, %cst {dimension_numbers = #tpu.dot_dimension_numbers<[1], [0], [0], [1], [0, 0, 1, 1], [], []>} : vector<16x128xf32>, vector<128x128xf32>, vector<16x128xf32> -> vector<16x128xf32>
    %c0_4 = arith.constant 0 : index
    %c0_5 = arith.constant 0 : index
    %6 = vector.load %arg4[%c0_4, %c0_5] : memref<1x128xf32, #tpu.memory_space<vmem>>, vector<1x128xf32>
    %7 = vector.broadcast %6 : vector<1x128xf32> to vector<16x128xf32>
    %8 = arith.addf %5, %7 : vector<16x128xf32>
    %cst_6 = arith.constant 5.000000e-01 : f32
    %9 = vector.broadcast %cst_6 : f32 to vector<16x128xf32>
    %10 = arith.mulf %9, %8 : vector<16x128xf32>
    %cst_7 = arith.constant 0.707106769 : f32
    %11 = vector.broadcast %cst_7 : f32 to vector<16x128xf32>
    %12 = arith.mulf %8, %11 : vector<16x128xf32>
    %13 = math.erf %12 : vector<16x128xf32>
    %cst_8 = arith.constant 1.000000e+00 : f32
    %14 = vector.broadcast %cst_8 : f32 to vector<16x128xf32>
    %15 = arith.addf %14, %13 : vector<16x128xf32>
    %16 = arith.mulf %10, %15 : vector<16x128xf32>
    %c0_9 = arith.constant 0 : index
    %c0_10 = arith.constant 0 : index
    %17 = vector.load %arg5[%c0_9, %c0_10] : memref<128x128xf32, #tpu.memory_space<vmem>>, vector<128x128xf32>
    %c0_11 = arith.constant 0 : index
    %c0_12 = arith.constant 0 : index
    %18 = vector.load %arg8[%c0_11, %c0_12] : memref<16x128xf32, #tpu.memory_space<vmem>>, vector<16x128xf32>
    %cst_13 = arith.constant dense<0.000000e+00> : vector<16x128xf32>
    %19 = tpu.matmul %16, %17, %cst_13 {dimension_numbers = #tpu.dot_dimension_numbers<[1], [0], [0], [1], [0, 0, 1, 1], [], []>} : vector<16x128xf32>, vector<128x128xf32>, vector<16x128xf32> -> vector<16x128xf32>
    %20 = arith.addf %18, %19 : vector<16x128xf32>
    %c0_14 = arith.constant 0 : index
    %c0_15 = arith.constant 0 : index
    %21 = vector.load %arg8[%c0_14, %c0_15] : memref<16x128xf32, #tpu.memory_space<vmem>>, vector<16x128xf32>
    tpu.vector_store %arg8[%c0_14, %c0_15], %20 {strides = array<i32>} : memref<16x128xf32, #tpu.memory_space<vmem>>, vector<16x128xf32>,
    %c1_i32 = arith.constant 1 : i32
    %22 = arith.cmpi eq, %arg1, %c1_i32 : i32
    %23 = arith.extui %22 : i1 to i32
    %c0_i32_16 = arith.constant 0 : i32
    %24 = arith.cmpi ne, %23, %c0_i32_16 : i32
    scf.if %24 {
      %c0_17 = arith.constant 0 : index
      %c0_18 = arith.constant 0 : index
      %25 = vector.load %arg8[%c0_17, %c0_18] : memref<16x128xf32, #tpu.memory_space<vmem>>, vector<16x128xf32>
      %c0_19 = arith.constant 0 : index
      %c0_20 = arith.constant 0 : index
      %26 = vector.load %arg6[%c0_19, %c0_20] : memref<1x128xf32, #tpu.memory_space<vmem>>, vector<1x128xf32>
      %27 = vector.broadcast %26 : vector<1x128xf32> to vector<16x128xf32>
      %28 = arith.addf %25, %27 : vector<16x128xf32>
      %c0_21 = arith.constant 0 : index
      %c0_22 = arith.constant 0 : index
      %29 = vector.load %arg7[%c0_21, %c0_22] : memref<16x128xf32, #tpu.memory_space<vmem>>, vector<16x128xf32>
      tpu.vector_store %arg7[%c0_21, %c0_22], %28 {strides = array<i32>} : memref<16x128xf32, #tpu.memory_space<vmem>>, vector<16x128xf32>,
    } else {
    }
    return
  }
  func.func @transform_0(%arg0: i32, %arg1: i32) -> (i32, i32) {
    %c0_i32 = arith.constant 0 : i32
    %c0_i32_0 = arith.constant 0 : i32
    return %arg0, %c0_i32 : i32, i32
  }
  func.func @transform_1(%arg0: i32, %arg1: i32) -> (i32, i32) {
    %c0_i32 = arith.constant 0 : i32
    %c0_i32_0 = arith.constant 0 : i32
    return %c0_i32, %arg1 : i32, i32
  }
  func.func @transform_2(%arg0: i32, %arg1: i32) -> (i32, i32) {
    %c0_i32 = arith.constant 0 : i32
    %c0_i32_0 = arith.constant 0 : i32
    return %c0_i32, %arg1 : i32, i32
  }
  func.func @transform_3(%arg0: i32, %arg1: i32) -> (i32, i32) {
    %c0_i32 = arith.constant 0 : i32
    %c0_i32_0 = arith.constant 0 : i32
    return %arg1, %c0_i32 : i32, i32
  }
  func.func @transform_4(%arg0: i32, %arg1: i32) -> (i32, i32) {
    %c0_i32 = arith.constant 0 : i32
    %c0_i32_0 = arith.constant 0 : i32
    %c0_i32_1 = arith.constant 0 : i32
    return %c0_i32, %c0_i32_0 : i32, i32
  }
  func.func @transform_5(%arg0: i32, %arg1: i32) -> (i32, i32) {
    %c0_i32 = arith.constant 0 : i32
    %c0_i32_0 = arith.constant 0 : i32
    return %arg0, %c0_i32 : i32, i32
  }
}

</mosaic_0001>

<llo_original>
// kernel: transformer_feed_forward.1
$region0: #{transformer_feed_forward.1}
  #allocation0 [shape = 'u32[]', space=smem, size = 0x4, offset = 0x4, fixed_abs, tag = 'smem constant byte address 0x4 - core index']
  #allocation1 [shape = 'u32[72,128]{1,0:T(1,128)}', space=vmem, size = 0x9000, scoped, tag = 'internal scratch']
  #allocation2 [shape = 'f32[16,128]{1,0:T(8,128)}', space=vmem, size = 0x2000, scoped, tag = 'scratch operand']
  %s0 = inlined_call_operand.hbm [shape: f32[16,128], index: 0, kind: input, shape index: {}]
  %s1 = inlined_call_operand.hbm [shape: f32[128,256], index: 1, kind: input, shape index: {}]
  %s2 = inlined_call_operand.hbm [shape: f32[1,256], index: 2, kind: input, shape index: {}]
  %s3 = inlined_call_operand.hbm [shape: f32[256,128], index: 3, kind: input, shape index: {}]
  %s4 = inlined_call_operand.vmem [shape: f32[1,128], index: 4, kind: input, shape index: {}]
  %s5 = inlined_call_operand.hbm [shape: f32[16,128], index: 5, kind: output, shape index: {}]
  %s6 = sld [smem:[#allocation0]]
  $region77: #{transformer_feed_forward.1} parent=0
    _
  %s8 = ssub.s32 1, %s6
  %s9 = scalar_select 0, %s8, %s6
  $region1: #{transformer_feed_forward.1} parent=0
    #allocation3 [shape = 'u8[8192]{0}', space=vmem, size = 0x2000, scoped, tag = 'input window, operand 0, single buffered']
    #allocation4 [shape = 's32[2]{0}', space=sflag, size = 0x8, scoped, tag = 'scoped memory for transformer_feed_forward.1']
    #allocation5 [shape = 's32[2]{0}', space=sflag, size = 0x8, scoped, tag = 'scoped memory for transformer_feed_forward.1']
    #allocation6 [shape = 'u8[131072]{0}', space=vmem, size = 0x20000, scoped, tag = 'input window, operand 1']
    #allocation7 [shape = 's32[2]{0}', space=sflag, size = 0x8, scoped, tag = 'scoped memory for transformer_feed_forward.1']
    #allocation8 [shape = 'u8[1024]{0}', space=vmem, size = 0x400, scoped, tag = 'input window, operand 2']
    #allocation9 [shape = 'u8[131072]{0}', space=vmem, size = 0x20000, scoped, tag = 'input window, operand 3']
    #allocation10 [shape = 's32[2]{0}', space=sflag, size = 0x8, scoped, tag = 'scoped memory for transformer_feed_forward.1']
    #allocation11 [shape = 'u8[8192]{0}', space=vmem, size = 0x2000, scoped, tag = 'output window, operand 0, single buffered']
    %10 = vsyncpa [#allocation4], 0
    %11 = vsyncpa [#allocation7], 0
    %s12 = scalar_lea.sflag [#allocation7], 1
    %13 = vsyncpa %s12, 0
    %14 = vsyncpa [#allocation10], 0
    %s15 = scalar_lea.sflag [#allocation10], 1
    %16 = vsyncpa %s15, 0
    %17 = vsyncpa [#allocation5], 0
    loop: start=0, step=1, limit=4
    $region2: #{transformer_feed_forward.1} parent=1 // loop_pre_header
      _
    $region3: #{transformer_feed_forward.1} parent=1 // loop_header
      %s19 = sphi 0, %s23
      %p20 = scmp.ge.s32.totalorder %s19, 4
      %s26 = sphi 0, %s38
      %s27 = sphi 0, %s34
      %s28 = sphi 0, %s26
      %s29 = sphi 0, %s27
      %s30 = sphi 0, %s28
      %s31 = sphi 0, %s29
      %s41 = sphi 0, %s43
      %s44 = sphi 0, %s41
      %s45 = sphi 0, %s44
      %s61 = sphi 0, %s45
      %s67 = sphi 0, %s69
      %s70 = sphi 0, %s67
      %s71 = sphi 0, %s70
      %s87 = sphi 0, %s71
      %s93 = sphi 0, %s95
      %s96 = sphi 0, %s93
      %s97 = sphi 0, %s96
      %s113 = sphi 0, %s97
      %s119 = sphi 0, %s121
      %s122 = sphi 0, %s119
      %s123 = sphi 0, %s122
      %s139 = sphi 0, %s123
      %s143 = sphi 0, %s143
      %s145 = sphi 0, %s143
      %s146 = sphi 0, %s145
      %s160 = sphi 0, %s146
      %s166 = sphi 0, %s168
      %s169 = sphi 0, %s166
      %s170 = sphi 0, %s169
      %s186 = sphi 0, %s170
    $region4: #{transformer_feed_forward.1} parent=1 // loop_header_branch
      %22 = sbr.rel (%p20) target = $region8
    $region5: #{transformer_feed_forward.1} parent=1 // loop_body
      %s24 = ssub.s32 %s19, 1
      %s25 = ssub.s32 %s19, 2
      %s32 = sadd.s32 1, %s27
      %p33 = scmp.ge.s32.totalorder %s32, 2
      %s34 = scalar_select %p33, 0, %s32
      %s35 = sadd.s32 1, %s26
      %s36 = scalar_select %p33, %s35, %s26
      %p37 = scmp.ge.s32.totalorder %s36, 1
      %s38 = scalar_select %p37, 0, %s36
      %s39 = ssub.s32 %s26, %s38
      %p40 = scmp.eq.s32.totalorder %s39, 0
      %s42 = sadd.s32 %s41, 1
      %s43 = scalar_select %p40, %s41, %s42
      %p46 = pneg %p40
      %p47 = scmp.eq.s32.totalorder %s19, 1
      %p48 = por %p46, %p47
      %p49 = scmp.ne.s32.totalorder %s41, %s44
      %p50 = scmp.eq.s32.totalorder %s19, 0
      %p51 = por %p49, %p50
      %p52 = scmp.ne.s32.totalorder %s41, %s44
      %p53 = scmp.eq.s32.totalorder %s24, 1
      %p54 = por %p52, %p53
      %p55 = scmp.ne.s32.totalorder %s44, %s45
      %p56 = scmp.eq.s32.totalorder %s24, 0
      %p57 = por %p55, %p56
      %p58 = scmp.ne.s32.totalorder %s44, %s45
      %p59 = scmp.eq.s32.totalorder %s25, 1
      %p60 = por %p58, %p59
      %p62 = scmp.ne.s32.totalorder %s45, %s61
      %p63 = scmp.eq.s32.totalorder %s25, 0
      %p64 = por %p62, %p63
      %s65 = ssub.s32 %s27, %s34
      %p66 = scmp.eq.s32.totalorder %s65, 0
      %s68 = sadd.s32 %s67, 1
      %s69 = scalar_select %p66, %s67, %s68
      %p72 = pneg %p66
      %p73 = scmp.eq.s32.totalorder %s19, 1
      %p74 = por %p72, %p73
      %p75 = scmp.ne.s32.totalorder %s67, %s70
      %p76 = scmp.eq.s32.totalorder %s19, 0
      %p77 = por %p75, %p76
      %p78 = scmp.ne.s32.totalorder %s67, %s70
      %p79 = scmp.eq.s32.totalorder %s24, 1
      %p80 = por %p78, %p79
      %p81 = scmp.ne.s32.totalorder %s70, %s71
      %p82 = scmp.eq.s32.totalorder %s24, 0
      %p83 = por %p81, %p82
      %p84 = scmp.ne.s32.totalorder %s70, %s71
      %p85 = scmp.eq.s32.totalorder %s25, 1
      %p86 = por %p84, %p85
      %p88 = scmp.ne.s32.totalorder %s71, %s87
      %p89 = scmp.eq.s32.totalorder %s25, 0
      %p90 = por %p88, %p89
      %s91 = ssub.s32 %s27, %s34
      %p92 = scmp.eq.s32.totalorder %s91, 0
      %s94 = sadd.s32 %s93, 1
      %s95 = scalar_select %p92, %s93, %s94
      %p98 = pneg %p92
      %p99 = scmp.eq.s32.totalorder %s19, 1
      %p100 = por %p98, %p99
      %p101 = scmp.ne.s32.totalorder %s93, %s96
      %p102 = scmp.eq.s32.totalorder %s19, 0
      %p103 = por %p101, %p102
      %p104 = scmp.ne.s32.totalorder %s93, %s96
      %p105 = scmp.eq.s32.totalorder %s24, 1
      %p106 = por %p104, %p105
      %p107 = scmp.ne.s32.totalorder %s96, %s97
      %p108 = scmp.eq.s32.totalorder %s24, 0
      %p109 = por %p107, %p108
      %p110 = scmp.ne.s32.totalorder %s96, %s97
      %p111 = scmp.eq.s32.totalorder %s25, 1
      %p112 = por %p110, %p111
      %p114 = scmp.ne.s32.totalorder %s97, %s113
      %p115 = scmp.eq.s32.totalorder %s25, 0
      %p116 = por %p114, %p115
      %s117 = ssub.s32 %s27, %s34
      %p118 = scmp.eq.s32.totalorder %s117, 0
      %s120 = sadd.s32 %s119, 1
      %s121 = scalar_select %p118, %s119, %s120
      %p124 = pneg %p118
      %p125 = scmp.eq.s32.totalorder %s19, 1
      %p126 = por %p124, %p125
      %p127 = scmp.ne.s32.totalorder %s119, %s122
      %p128 = scmp.eq.s32.totalorder %s19, 0
      %p129 = por %p127, %p128
      %p130 = scmp.ne.s32.totalorder %s119, %s122
      %p131 = scmp.eq.s32.totalorder %s24, 1
      %p132 = por %p130, %p131
      %p133 = scmp.ne.s32.totalorder %s122, %s123
      %p134 = scmp.eq.s32.totalorder %s24, 0
      %p135 = por %p133, %p134
      %p136 = scmp.ne.s32.totalorder %s122, %s123
      %p137 = scmp.eq.s32.totalorder %s25, 1
      %p138 = por %p136, %p137
      %p140 = scmp.ne.s32.totalorder %s123, %s139
      %p141 = scmp.eq.s32.totalorder %s25, 0
      %p142 = por %p140, %p141
      %s144 = sadd.s32 %s143, 1
      %p147 = scmp.eq.s32.totalorder %s19, 1
      %p148 = scmp.ne.s32.totalorder %s143, %s145
      %p149 = scmp.eq.s32.totalorder %s19, 0
      %p150 = por %p148, %p149
      %p151 = scmp.ne.s32.totalorder %s143, %s145
      %p152 = scmp.eq.s32.totalorder %s24, 1
      %p153 = por %p151, %p152
      %p154 = scmp.ne.s32.totalorder %s145, %s146
      %p155 = scmp.eq.s32.totalorder %s24, 0
      %p156 = por %p154, %p155
      %p157 = scmp.ne.s32.totalorder %s145, %s146
      %p158 = scmp.eq.s32.totalorder %s25, 1
      %p159 = por %p157, %p158
      %p161 = scmp.ne.s32.totalorder %s146, %s160
      %p162 = scmp.eq.s32.totalorder %s25, 0
      %p163 = por %p161, %p162
      %s164 = ssub.s32 %s26, %s38
      %p165 = scmp.eq.s32.totalorder %s164, 0
      %s167 = sadd.s32 %s166, 1
      %s168 = scalar_select %p165, %s166, %s167
      %p171 = pneg %p165
      %p172 = scmp.eq.s32.totalorder %s19, 1
      %p173 = por %p171, %p172
      %p174 = scmp.ne.s32.totalorder %s166, %s169
      %p175 = scmp.eq.s32.totalorder %s19, 0
      %p176 = por %p174, %p175
      %p177 = scmp.ne.s32.totalorder %s166, %s169
      %p178 = scmp.eq.s32.totalorder %s24, 1
      %p179 = por %p177, %p178
      %p180 = scmp.ne.s32.totalorder %s169, %s170
      %p181 = scmp.eq.s32.totalorder %s24, 0
      %p182 = por %p180, %p181
      %p183 = scmp.ne.s32.totalorder %s169, %s170
      %p184 = scmp.eq.s32.totalorder %s25, 1
      %p185 = por %p183, %p184
      %p187 = scmp.ne.s32.totalorder %s170, %s186
      %p188 = scmp.eq.s32.totalorder %s25, 0
      %p189 = por %p187, %p188
      %p190 = scmp.le.s32.totalorder 1, %s19
      %p191 = scmp.lt.s32.totalorder %s19, 3
      %p192 = pnand %p190, %p191
      %p193 = pneg %p192
      // Predicated region
      $region9: #{transformer_feed_forward.1} parent=5 // pred_check
        _
      $region10: #{transformer_feed_forward.1} parent=5 // pred_check_branch
        %195 = sbr.rel (%p192) target = $region12
      $region11: #{transformer_feed_forward.1} parent=5 // pred_region
        %s196 = ssub.s32 %s19, 1
        // Predicated region
        $region13: #{transformer_feed_forward.1} parent=11 // pred_check
          %p197 = pneg %p57
        $region14: #{transformer_feed_forward.1} parent=11 // pred_check_branch
          %199 = sbr.rel (%p197) target = $region16
        $region15: #{transformer_feed_forward.1} parent=11 // pred_region
          %s200 = smul.u32 2, %s28
          %202 = vsyncadd [#allocation4], 0
          %s203 = smul.addr %s200, 8
          %s204 = scalar_lea.hbm %s0, %s203
          %s205 = sshll.u32 %s204, 4
          %s206 = int_to_ptr.hbm [resolvable:$true] %s205
          %s207 = sshll.u32 [#allocation3], 4
          %s208 = int_to_ptr.vmem [resolvable:$true] %s207
          %213 = dma.hbm_to_vmem [thread:$0]  %s206, 256, %s208, [#allocation4], 128, 128, 8
        $region16: #{transformer_feed_forward.1} parent=11 // pred_fallthru
          _
        // Predicated region
        $region17: #{transformer_feed_forward.1} parent=11 // pred_check
          %p214 = pneg %p156
        $region18: #{transformer_feed_forward.1} parent=11 // pred_check_branch
          %216 = sbr.rel (%p214) target = $region20
        $region19: #{transformer_feed_forward.1} parent=11 // pred_region
          _
        $region20: #{transformer_feed_forward.1} parent=11 // pred_fallthru
          _
      $region12: #{transformer_feed_forward.1} parent=5 // pred_fallthru
        _
      %p217 = scmp.lt.s32.totalorder %s19, 2
      // Predicated region
      $region21: #{transformer_feed_forward.1} parent=5 // pred_check
        %p218 = pneg %p217
      $region22: #{transformer_feed_forward.1} parent=5 // pred_check_branch
        %220 = sbr.rel (%p218) target = $region24
      $region23: #{transformer_feed_forward.1} parent=5 // pred_region
        // Predicated region
        $region25: #{transformer_feed_forward.1} parent=23 // pred_check
          %p221 = pneg %p77
        $region26: #{transformer_feed_forward.1} parent=23 // pred_check_branch
          %223 = sbr.rel (%p221) target = $region28
        $region27: #{transformer_feed_forward.1} parent=23 // pred_region
          %s224 = sand.u32 %s19, 1
          %s225 = scalar_lea.sflag [#allocation7], %s224
          %s226 = sand.u32 %s67, 1
          %s227 = smul.addr %s226, 128
          %s228 = scalar_lea.vmem [#allocation6], %s227
          %230 = vsyncadd %s225, 0
          %s231 = smul.addr %s27, 8
          %s232 = scalar_lea.hbm %s1, %s231
          %s233 = sshll.u32 %s232, 4
          %s234 = int_to_ptr.hbm [resolvable:$true] %s233
          %s235 = sshll.u32 %s228, 4
          %s236 = int_to_ptr.vmem [resolvable:$true] %s235
          %241 = dma.hbm_to_vmem [thread:$0]  %s234, 2048, %s236, %s225, 256, 128, 8
        $region28: #{transformer_feed_forward.1} parent=23 // pred_fallthru
          _
        // Predicated region
        $region29: #{transformer_feed_forward.1} parent=23 // pred_check
          %p242 = pneg %p103
        $region30: #{transformer_feed_forward.1} parent=23 // pred_check_branch
          %244 = sbr.rel (%p242) target = $region32
        $region31: #{transformer_feed_forward.1} parent=23 // pred_region
          %s245 = sand.u32 %s19, 1
          %s246 = scalar_lea.sflag [#allocation7], %s245
          %s247 = sand.u32 %s93, 1
          %s248 = scalar_lea.vmem [#allocation8], %s247
          %250 = vsyncadd %s246, 0
          %s251 = scalar_lea.hbm %s2, %s27
          %s253 = sshll.u32 %s251, 4
          %s254 = int_to_ptr.hbm [resolvable:$true] %s253
          %s255 = sshll.u32 %s248, 4
          %s256 = int_to_ptr.vmem [resolvable:$true] %s255
          %258 = dma.hbm_to_vmem [thread:$0]  %s254, 16, %s256, %s246
        $region32: #{transformer_feed_forward.1} parent=23 // pred_fallthru
          _
        // Predicated region
        $region33: #{transformer_feed_forward.1} parent=23 // pred_check
          %p259 = pneg %p129
        $region34: #{transformer_feed_forward.1} parent=23 // pred_check_branch
          %261 = sbr.rel (%p259) target = $region36
        $region35: #{transformer_feed_forward.1} parent=23 // pred_region
          %s262 = sand.u32 %s119, 1
          %s263 = scalar_lea.sflag [#allocation10], %s262
          %s264 = sand.u32 %s119, 1
          %s265 = smul.addr %s264, 128
          %s266 = scalar_lea.vmem [#allocation9], %s265
          %s267 = smul.u32 16, %s27
          %269 = vsyncadd %s263, 0
          %s270 = smul.addr %s267, 8
          %s271 = scalar_lea.hbm %s3, %s270
          %s272 = sshll.u32 %s271, 4
          %s273 = int_to_ptr.hbm [resolvable:$true] %s272
          %s274 = sshll.u32 %s266, 4
          %s275 = int_to_ptr.vmem [resolvable:$true] %s274
          %280 = dma.hbm_to_vmem [thread:$0]  %s273, 2048, %s275, %s263, 128, 128, 8
        $region36: #{transformer_feed_forward.1} parent=23 // pred_fallthru
          _
      $region24: #{transformer_feed_forward.1} parent=5 // pred_fallthru
        _
      %p281 = scmp.le.s32.totalorder 1, %s19
      %p282 = scmp.lt.s32.totalorder %s19, 3
      %p283 = pnand %p281, %p282
      %p284 = pneg %p283
      // Predicated region
      $region37: #{transformer_feed_forward.1} parent=5 // pred_check
        _
      $region38: #{transformer_feed_forward.1} parent=5 // pred_check_branch
        %286 = sbr.rel (%p283) target = $region40
      $region39: #{transformer_feed_forward.1} parent=5 // pred_region
        %s287 = ssub.s32 %s19, 1
        // Predicated region
        $region41: #{transformer_feed_forward.1} parent=39 // pred_check
          %p288 = pneg %p57
        $region42: #{transformer_feed_forward.1} parent=39 // pred_check_branch
          %290 = sbr.rel (%p288) target = $region44
        $region43: #{transformer_feed_forward.1} parent=39 // pred_region
          %292 = dma.done [#allocation4], 256
        $region44: #{transformer_feed_forward.1} parent=39 // pred_fallthru
          _
        %s293 = sand.u32 %s24, 1
        %s294 = scalar_lea.sflag [#allocation7], %s293
        %s295 = sand.u32 %s70, 1
        %s296 = smul.addr %s295, 128
        %s297 = scalar_lea.vmem [#allocation6], %s296
        // Predicated region
        $region45: #{transformer_feed_forward.1} parent=39 // pred_check
          %p298 = pneg %p83
        $region46: #{transformer_feed_forward.1} parent=39 // pred_check_branch
          %300 = sbr.rel (%p298) target = $region48
        $region47: #{transformer_feed_forward.1} parent=39 // pred_region
          %302 = dma.done %s294, 2048
        $region48: #{transformer_feed_forward.1} parent=39 // pred_fallthru
          _
        %s303 = sand.u32 %s24, 1
        %s304 = scalar_lea.sflag [#allocation7], %s303
        %s305 = sand.u32 %s96, 1
        %s306 = scalar_lea.vmem [#allocation8], %s305
        // Predicated region
        $region49: #{transformer_feed_forward.1} parent=39 // pred_check
          %p307 = pneg %p109
        $region50: #{transformer_feed_forward.1} parent=39 // pred_check_branch
          %309 = sbr.rel (%p307) target = $region52
        $region51: #{transformer_feed_forward.1} parent=39 // pred_region
          %311 = dma.done %s304, 16
        $region52: #{transformer_feed_forward.1} parent=39 // pred_fallthru
          _
        %s312 = sand.u32 %s122, 1
        %s313 = scalar_lea.sflag [#allocation10], %s312
        %s314 = sand.u32 %s122, 1
        %s315 = smul.addr %s314, 128
        %s316 = scalar_lea.vmem [#allocation9], %s315
        // Predicated region
        $region53: #{transformer_feed_forward.1} parent=39 // pred_check
          %p317 = pneg %p135
        $region54: #{transformer_feed_forward.1} parent=39 // pred_check_branch
          %319 = sbr.rel (%p317) target = $region56
        $region55: #{transformer_feed_forward.1} parent=39 // pred_region
          %321 = dma.done %s313, 2048
        $region56: #{transformer_feed_forward.1} parent=39 // pred_fallthru
          _
        %p322 = pneg %p57
        %p323 = pneg %p54
        %s324 = sand.u32 %s24, 1
        %s325 = scalar_lea.sflag [#allocation7], %s324
        %s326 = sand.u32 %s70, 1
        %s327 = smul.addr %s326, 128
        %s328 = scalar_lea.vmem [#allocation6], %s327
        %p329 = pneg %p83
        %p330 = pneg %p80
        %s331 = sand.u32 %s24, 1
        %s332 = scalar_lea.sflag [#allocation7], %s331
        %s333 = sand.u32 %s96, 1
        %s334 = scalar_lea.vmem [#allocation8], %s333
        %p335 = pneg %p109
        %p336 = pneg %p106
        %s337 = sand.u32 %s122, 1
        %s338 = scalar_lea.sflag [#allocation10], %s337
        %s339 = sand.u32 %s122, 1
        %s340 = smul.addr %s339, 128
        %s341 = scalar_lea.vmem [#allocation9], %s340
        %p342 = pneg %p135
        %p343 = pneg %p132
        %p344 = pneg %p156
        %p345 = pneg %p153
        %p346 = pneg %p182
        %p347 = pneg %p179
        %s348 = smul.u32 2, %s28
        %s349 = smul.u32 16, %s29
        %s350 = smul.u32 2, %s28
        %p351 = scmp.eq.s32.totalorder %s29, 0
        // Predicated region
        $region57: #{transformer_feed_forward.1} parent=39 // pred_check
          %p352 = pneg %p351
        $region58: #{transformer_feed_forward.1} parent=39 // pred_check_branch
          %354 = sbr.rel (%p352) target = $region60
        $region59: #{transformer_feed_forward.1} parent=39 // pred_region
          %355 = vst [vmem:[#allocation2] sm:$0xff] 0.0
          %356 = vst [vmem:[#allocation2 + $0x8] sm:$0xff] 0.0
        $region60: #{transformer_feed_forward.1} parent=39 // pred_fallthru
          _
        %v357 = vld [vmem:[#allocation3] sm:$0xff]
        %v358 = vld [vmem:[#allocation3 + $0x8] sm:$0xff]
        %v359 = vld [vmem:[%s297] sm:$0xff]
        %v360 = vld [vmem:[%s297 + $0x8] sm:$0xff]
        %v361 = vld [vmem:[%s297 + $0x10] sm:$0xff]
        %v362 = vld [vmem:[%s297 + $0x18] sm:$0xff]
        %v363 = vld [vmem:[%s297 + $0x20] sm:$0xff]
        %v364 = vld [vmem:[%s297 + $0x28] sm:$0xff]
        %v365 = vld [vmem:[%s297 + $0x30] sm:$0xff]
        %v366 = vld [vmem:[%s297 + $0x38] sm:$0xff]
        %v367 = vld [vmem:[%s297 + $0x40] sm:$0xff]
        %v368 = vld [vmem:[%s297 + $0x48] sm:$0xff]
        %v369 = vld [vmem:[%s297 + $0x50] sm:$0xff]
        %v370 = vld [vmem:[%s297 + $0x58] sm:$0xff]
        %v371 = vld [vmem:[%s297 + $0x60] sm:$0xff]
        %v372 = vld [vmem:[%s297 + $0x68] sm:$0xff]
        %v373 = vld [vmem:[%s297 + $0x70] sm:$0xff]
        %v374 = vld [vmem:[%s297 + $0x78] sm:$0xff]
        %v375 = vld [vmem:[%s306] sm:$0x1]
        %v377 = vperm.slane %v375, 0
        %379 = vmatpush.msra.mxu0 %v374
        %380 = vmatpush.msra.mxu0 %v373
        %381 = vmatpush.msra.mxu0 %v372
        %382 = vmatpush.msra.mxu0 %v371
        %383 = vmatpush.msra.mxu0 %v370
        %384 = vmatpush.msra.mxu0 %v369
        %385 = vmatpush.msra.mxu0 %v368
        %386 = vmatpush.msra.mxu0 %v367
        %387 = vmatpush.msra.mxu0 %v366
        %388 = vmatpush.msra.mxu0 %v365
        %389 = vmatpush.msra.mxu0 %v364
        %390 = vmatpush.msra.mxu0 %v363
        %391 = vmatpush.msra.mxu0 %v362
        %392 = vmatpush.msra.mxu0 %v361
        %393 = vmatpush.msra.mxu0 %v360
        %394 = vmatpush.msra.mxu0 %v359
        %395 = vmatmul.f32.gmra.mxu0 %v357
        %v396 = vpop.f32.mrf.mxu0
        %v397 = vadd.f32 %v377, %v396
        %398 = vmatmul.f32.gmra.mxu0 %v358
        %v399 = vpop.f32.mrf.mxu0
        %v400 = vadd.f32 %v377, %v399
        %401 = vdwg.mxu0
        %v402 = vmul.f32 %v397, 0.5
        %v403 = vmul.f32 %v400, 0.5
        %v404 = vmul.f32 %v397, 0.70710677
        %v405 = vmul.f32 %v400, 0.70710677
        %v406 = vmul.f32 %v404, %v404
        %v407 = vmin.f32 16.0, %v406
        %v408 = vmul.f32 %v407, 2.1237322e-06
        %v409 = vadd.f32 %v408, 0.00028619796
        %v410 = vmul.f32 %v407, %v409
        %v411 = vadd.f32 %v410, 0.0036580483
        %v412 = vmul.f32 %v407, %v411
        %v413 = vadd.f32 %v412, 0.05243302
        %v414 = vmul.f32 %v407, %v413
        %v415 = vadd.f32 %v414, 0.18741608
        %v416 = vmul.f32 %v407, %v415
        %v417 = vadd.f32 %v416, 1.1283791
        %v418 = vmul.f32 %v404, %v417
        %v419 = vmul.f32 %v407, 3.8918573e-05
        %v420 = vadd.f32 %v419, 0.001143296
        %v421 = vmul.f32 %v407, %v420
        %v422 = vadd.f32 %v421, 0.014752088
        %v423 = vmul.f32 %v407, %v422
        %v424 = vadd.f32 %v423, 0.112945676
        %v425 = vmul.f32 %v407, %v424
        %v426 = vadd.f32 %v425, 0.4994258
        %v427 = vmul.f32 %v407, %v426
        %v428 = vadd.f32 %v427, 1.0
        %v429 = vrcp.pop %v428
        %v430 = vmul.f32 %v428, %v429
        %v431 = vsub.f32 1.0, %v430
        %v432 = vmul.f32 %v429, %v431
        %v433 = vadd.f32 %v429, %v432
        %vm434 = vweird.f32 %v428
        %vm435 = vweird.f32 %v429
        %vm436 = vmor %vm434, %vm435
        %v437 = vsel %vm436, %v429, %v433
        %v438 = vand.u32 2147483647, %v428
        %vm439 = vcmp.eq.f32.partialorder %v438, 8.507059e+37
        %v440 = vand.u32 %v428, 2147483648
        %v441 = vor.u32 1.1754944e-38, %v440
        %v442 = vsel %vm439, %v441, %v437
        %v443 = vmul.f32 %v418, %v442
        %v444 = vmin.f32 %v443, 1.0
        %v445 = vmax.f32 %v444, -1.0
        %v446 = vmul.f32 %v405, %v405
        %v447 = vmin.f32 16.0, %v446
        %v448 = vmul.f32 %v447, 2.1237322e-06
        %v449 = vadd.f32 %v448, 0.00028619796
        %v450 = vmul.f32 %v447, %v449
        %v451 = vadd.f32 %v450, 0.0036580483
        %v452 = vmul.f32 %v447, %v451
        %v453 = vadd.f32 %v452, 0.05243302
        %v454 = vmul.f32 %v447, %v453
        %v455 = vadd.f32 %v454, 0.18741608
        %v456 = vmul.f32 %v447, %v455
        %v457 = vadd.f32 %v456, 1.1283791
        %v458 = vmul.f32 %v405, %v457
        %v459 = vmul.f32 %v447, 3.8918573e-05
        %v460 = vadd.f32 %v459, 0.001143296
        %v461 = vmul.f32 %v447, %v460
        %v462 = vadd.f32 %v461, 0.014752088
        %v463 = vmul.f32 %v447, %v462
        %v464 = vadd.f32 %v463, 0.112945676
        %v465 = vmul.f32 %v447, %v464
        %v466 = vadd.f32 %v465, 0.4994258
        %v467 = vmul.f32 %v447, %v466
        %v468 = vadd.f32 %v467, 1.0
        %v469 = vrcp.pop %v468
        %v470 = vmul.f32 %v468, %v469
        %v471 = vsub.f32 1.0, %v470
        %v472 = vmul.f32 %v469, %v471
        %v473 = vadd.f32 %v469, %v472
        %vm474 = vweird.f32 %v468
        %vm475 = vweird.f32 %v469
        %vm476 = vmor %vm474, %vm475
        %v477 = vsel %vm476, %v469, %v473
        %v478 = vand.u32 2147483647, %v468
        %vm479 = vcmp.eq.f32.partialorder %v478, 8.507059e+37
        %v480 = vand.u32 %v468, 2147483648
        %v481 = vor.u32 1.1754944e-38, %v480
        %v482 = vsel %vm479, %v481, %v477
        %v483 = vmul.f32 %v458, %v482
        %v484 = vmin.f32 %v483, 1.0
        %v485 = vmax.f32 %v484, -1.0
        %v486 = vadd.f32 %v445, 1.0
        %v487 = vadd.f32 %v485, 1.0
        %v488 = vmul.f32 %v402, %v486
        %v489 = vmul.f32 %v403, %v487
        %v490 = vld [vmem:[%s316] sm:$0xff]
        %v491 = vld [vmem:[%s316 + $0x8] sm:$0xff]
        %v492 = vld [vmem:[%s316 + $0x10] sm:$0xff]
        %v493 = vld [vmem:[%s316 + $0x18] sm:$0xff]
        %v494 = vld [vmem:[%s316 + $0x20] sm:$0xff]
        %v495 = vld [vmem:[%s316 + $0x28] sm:$0xff]
        %v496 = vld [vmem:[%s316 + $0x30] sm:$0xff]
        %v497 = vld [vmem:[%s316 + $0x38] sm:$0xff]
        %v498 = vld [vmem:[%s316 + $0x40] sm:$0xff]
        %v499 = vld [vmem:[%s316 + $0x48] sm:$0xff]
        %v500 = vld [vmem:[%s316 + $0x50] sm:$0xff]
        %v501 = vld [vmem:[%s316 + $0x58] sm:$0xff]
        %v502 = vld [vmem:[%s316 + $0x60] sm:$0xff]
        %v503 = vld [vmem:[%s316 + $0x68] sm:$0xff]
        %v504 = vld [vmem:[%s316 + $0x70] sm:$0xff]
        %v505 = vld [vmem:[%s316 + $0x78] sm:$0xff]
        %v506 = vld [vmem:[#allocation2] sm:$0xff]
        %v507 = vld [vmem:[#allocation2 + $0x8] sm:$0xff]
        %508 = vmatpush.msra.mxu0 %v505
        %509 = vmatpush.msra.mxu0 %v504
        %510 = vmatpush.msra.mxu0 %v503
        %511 = vmatpush.msra.mxu0 %v502
        %512 = vmatpush.msra.mxu0 %v501
        %513 = vmatpush.msra.mxu0 %v500
        %514 = vmatpush.msra.mxu0 %v499
        %515 = vmatpush.msra.mxu0 %v498
        %516 = vmatpush.msra.mxu0 %v497
        %517 = vmatpush.msra.mxu0 %v496
        %518 = vmatpush.msra.mxu0 %v495
        %519 = vmatpush.msra.mxu0 %v494
        %520 = vmatpush.msra.mxu0 %v493
        %521 = vmatpush.msra.mxu0 %v492
        %522 = vmatpush.msra.mxu0 %v491
        %523 = vmatpush.msra.mxu0 %v490
        %524 = vmatmul.f32.gmra.mxu0 %v488
        %v525 = vpop.f32.mrf.mxu0
        %v526 = vadd.f32 0.0, %v525
        %527 = vmatmul.f32.gmra.mxu0 %v489
        %v528 = vpop.f32.mrf.mxu0
        %v529 = vadd.f32 0.0, %v528
        %530 = vdwg.mxu0
        %v531 = vadd.f32 %v506, %v526
        %v532 = vadd.f32 %v507, %v529
        %533 = vst [vmem:[#allocation2] sm:$0xff] %v531
        %534 = vst [vmem:[#allocation2 + $0x8] sm:$0xff] %v532
        %p535 = scmp.eq.s32.totalorder %s29, 1
        // Predicated region
        $region61: #{transformer_feed_forward.1} parent=39 // pred_check
          %p536 = pneg %p535
        $region62: #{transformer_feed_forward.1} parent=39 // pred_check_branch
          %538 = sbr.rel (%p536) target = $region64
        $region63: #{transformer_feed_forward.1} parent=39 // pred_region
          %v539 = vld [vmem:[#allocation2] sm:$0xff]
          %v540 = vld [vmem:[#allocation2 + $0x8] sm:$0xff]
          %v541 = vld [vmem:[%s4] sm:$0x1]
          %v543 = vperm.slane %v541, 0
          %v545 = vadd.f32 %v539, %v543
          %v546 = vadd.f32 %v540, %v543
          %547 = vst [vmem:[#allocation11] sm:$0xff] %v545
          %548 = vst [vmem:[#allocation11 + $0x8] sm:$0xff] %v546
        $region64: #{transformer_feed_forward.1} parent=39 // pred_fallthru
          _
        // Predicated region
        $region65: #{transformer_feed_forward.1} parent=39 // pred_check
          %p549 = pneg %p179
        $region66: #{transformer_feed_forward.1} parent=39 // pred_check_branch
          %551 = sbr.rel (%p549) target = $region68
        $region67: #{transformer_feed_forward.1} parent=39 // pred_region
          %s552 = smul.u32 2, %s28
          %554 = vsyncadd [#allocation5], 0
          %s555 = smul.addr %s552, 8
          %s556 = scalar_lea.hbm %s5, %s555
          %s557 = sshll.u32 [#allocation11], 4
          %s558 = int_to_ptr.vmem [resolvable:$true] %s557
          %s559 = sshll.u32 %s556, 4
          %s560 = int_to_ptr.hbm [resolvable:$true] %s559
          %565 = dma.vmem_to_hbm [thread:$0]  %s558, 256, %s560, [#allocation5], 128, 128, 8
        $region68: #{transformer_feed_forward.1} parent=39 // pred_fallthru
          _
        // Predicated region
        $region69: #{transformer_feed_forward.1} parent=39 // pred_check
          %p566 = pneg %p179
        $region70: #{transformer_feed_forward.1} parent=39 // pred_check_branch
          %568 = sbr.rel (%p566) target = $region72
        $region71: #{transformer_feed_forward.1} parent=39 // pred_region
          %570 = dma.done [#allocation5], 256
        $region72: #{transformer_feed_forward.1} parent=39 // pred_fallthru
          _
      $region40: #{transformer_feed_forward.1} parent=5 // pred_fallthru
        _
      %p571 = scmp.le.s32.totalorder 2, %s19
      // Predicated region
      $region73: #{transformer_feed_forward.1} parent=5 // pred_check
        %p572 = pneg %p571
      $region74: #{transformer_feed_forward.1} parent=5 // pred_check_branch
        %574 = sbr.rel (%p572) target = $region76
      $region75: #{transformer_feed_forward.1} parent=5 // pred_region
        %s575 = ssub.s32 %s19, 2
      $region76: #{transformer_feed_forward.1} parent=5 // pred_fallthru
        _
    $region6: #{transformer_feed_forward.1} parent=1 // loop_footer
      %s23 = sadd.s32 1, %s19
    $region7: #{transformer_feed_forward.1} parent=1 // loop_footer_branch
      %18 = sbr.rel target = $region3
    $region8: #{transformer_feed_forward.1} parent=1 // loop_exit
      _
    %576 = vsyncpa [#allocation4], 1
    %s577 = scalar_lea.sflag [#allocation4], 1
    %578 = vsyncpa %s577, 1
    %579 = vsyncpa [#allocation7], 1
    %s580 = scalar_lea.sflag [#allocation7], 1
    %581 = vsyncpa %s580, 1
    %582 = vsyncpa [#allocation10], 1
    %s583 = scalar_lea.sflag [#allocation10], 1
    %584 = vsyncpa %s583, 1
    %585 = vsyncpa [#allocation5], 1
    %s586 = scalar_lea.sflag [#allocation5], 1
    %587 = vsyncpa %s586, 1

</llo_original>
